<compile_context>
chip_gen: v7x
topology: tpu7x:2x2x1
jax: 0.10.0
libtpu: 0.0.40
codegen_flags: <defaults>
</compile_context>

<pallas_src>
import jax
import jax.numpy as jnp
from jax import lax
from jax.experimental import pallas as pl
from jax.experimental.pallas import tpu as pltpu


def _attn_kernel(wqk_ref, bqk_ref, wv_ref, bv_ref, x_ref, out_ref, val_ref, attn_ref):
    # Per-grid-step (= per-batch) views:
    #   x_ref   : (C, W)      this batch's feature map
    #   wqk_ref : (2*C8, C)   fused [wq; wk] 1x1-conv weights
    #   bqk_ref : (2*C8, 1)   fused [bq; bk] biases
    #   wv_ref  : (C, C)      value weights,  bv_ref : (C, 1) value bias
    #   out_ref : (C, W), val_ref : (C, W), attn_ref : (W, W)
    x = x_ref[...]

    # Fused q/k projection: one MXU push with M = 2*C8 instead of two M=C8 pushes.
    qk = jnp.dot(wqk_ref[...], x, preferred_element_type=jnp.float32) + bqk_ref[...]
    c8 = qk.shape[0] // 2
    q = qk[:c8, :]                 # (C8, W)  sublane-tile-aligned slice (C8 == 8)
    k = qk[c8:, :]                 # (C8, W)

    v = jnp.dot(wv_ref[...], x, preferred_element_type=jnp.float32) + bv_ref[...]  # (C, W)
    val_ref[...] = v

    # energy[i, j] = sum_c q[c, i] * k[c, j]   (transposed-lhs contraction, no .T)
    energy = lax.dot_general(q, k, (((0,), (0,)), ((), ())),
                             preferred_element_type=jnp.float32)           # (W, W)

    # numerically-stable softmax over keys (last axis); exact reciprocal -> rows sum to 1
    m = jnp.max(energy, axis=-1, keepdims=True)
    e = jnp.exp(energy - m)
    denom = jnp.sum(e, axis=-1, keepdims=True)
    attn = e * pl.reciprocal(denom, approx=False)                          # (W, W)
    attn_ref[...] = attn

    # out[c, i] = sum_j v[c, j] * attn[i, j]   (contract last axes: v @ attn^T, no .T)
    out_ref[...] = lax.dot_general(v, attn, (((1,), (1,)), ((), ())),
                                   preferred_element_type=jnp.float32)     # (C, W)


def attn_forward(x, wq, bq, wk, bk, wv, bv):
    """x: (B, C, W); conv1d(kernel_size=1) weights squeezed to (out_ch, in_ch)."""
    B, C, W = x.shape
    C8 = wq.shape[0]

    # Tiny weight-side prep only (a few KB; no activation-sized relayout):
    wqk = jnp.concatenate([wq, wk], axis=0)            # (2*C8, C)
    bqk = jnp.concatenate([bq, bk], axis=0)[:, None]   # (2*C8, 1)
    bv2 = bv[:, None]                                  # (C, 1)

    out, val, attn = pl.pallas_call(
        _attn_kernel,
        out_shape=(
            jax.ShapeDtypeStruct((B, C, W), jnp.float32),    # out
            jax.ShapeDtypeStruct((B, C, W), jnp.float32),    # proj_value
            jax.ShapeDtypeStruct((B, W, W), jnp.float32),    # attention
        ),
        grid=(B,),
        in_specs=[
            pl.BlockSpec((2 * C8, C), lambda b: (0, 0)),     # fused q/k weights
            pl.BlockSpec((2 * C8, 1), lambda b: (0, 0)),     # fused q/k biases
            pl.BlockSpec((C, C), lambda b: (0, 0)),          # value weights
            pl.BlockSpec((C, 1), lambda b: (0, 0)),          # value bias
            pl.BlockSpec((None, C, W), lambda b: (b, 0, 0)),  # x: per-batch block
        ],
        out_specs=(
            pl.BlockSpec((None, C, W), lambda b: (b, 0, 0)),
            pl.BlockSpec((None, C, W), lambda b: (b, 0, 0)),
            pl.BlockSpec((None, W, W), lambda b: (b, 0, 0)),
        ),
        compiler_params=pltpu.CompilerParams(
            dimension_semantics=("parallel",)),              # megacore on v7x
    )(wqk, bqk, wv, bv2, x)
    return out, val, attn


def _reference(x, wq, bq, wk, bk, wv, bv):
    # pure-JAX reference mirroring the PyTorch forward (full f32 precision)
    hp = lax.Precision.HIGHEST
    q = jnp.einsum('oc,bcw->bow', wq, x, precision=hp) + bq[None, :, None]
    k = jnp.einsum('oc,bcw->bow', wk, x, precision=hp) + bk[None, :, None]
    v = jnp.einsum('oc,bcw->bow', wv, x, precision=hp) + bv[None, :, None]
    energy = jnp.einsum('bcq,bck->bqk', q, k, precision=hp)
    attn = jax.nn.softmax(energy, axis=-1)
    out = jnp.einsum('bcw,bqw->bcq', v, attn, precision=hp)
    return out, v, attn


if __name__ == "__main__":
    # GenGIN uses Attn(n_fea) with n_fea=64 -> C=64, query/key channels C//8=8.
    # W=128 keeps every per-batch tile lane-dense.
    B, C, W = 2, 64, 128
    C8 = C // 8

    key = jax.random.PRNGKey(0)
    kx, kwq, kbq, kwk, kbk, kwv, kbv = jax.random.split(key, 7)

    x = jax.random.normal(kx, (B, C, W), dtype=jnp.float32)
    # Conv1d kernel_size=1 weights squeezed to (out_channels, in_channels)
    wq = jax.random.normal(kwq, (C8, C), dtype=jnp.float32) * 0.1
    bq = jax.random.normal(kbq, (C8,), dtype=jnp.float32) * 0.1
    wk = jax.random.normal(kwk, (C8, C), dtype=jnp.float32) * 0.1
    bk = jax.random.normal(kbk, (C8,), dtype=jnp.float32) * 0.1
    wv = jax.random.normal(kwv, (C, C), dtype=jnp.float32) * 0.1
    bv = jax.random.normal(kbv, (C,), dtype=jnp.float32) * 0.1
    # note: self.gamma is initialized in Attn.__init__ but never used in its forward,
    # so it is intentionally omitted here.

    out, val, attn = attn_forward(x, wq, bq, wk, bk, wv, bv)
    jax.block_until_ready((out, val, attn))

    r_out, r_val, r_attn = _reference(x, wq, bq, wk, bk, wv, bv)
    assert jnp.allclose(val, r_val, atol=1e-4, rtol=1e-4), "proj_value mismatch"
    assert jnp.allclose(attn, r_attn, atol=1e-3, rtol=1e-3), "attention mismatch"
    assert jnp.allclose(out, r_out, atol=1e-3, rtol=1e-3), "out mismatch"

    print("KERNEL_OK")
</pallas_src>

<mosaic_0001>
module attributes {stable_mosaic.version = 11 : i64} {
  func.func @_attn_kernel(%arg0: i32, %arg1: memref<16x64xf32, #tpu.memory_space<vmem>>, %arg2: memref<16x1xf32, #tpu.memory_space<vmem>>, %arg3: memref<64x64xf32, #tpu.memory_space<vmem>>, %arg4: memref<64x1xf32, #tpu.memory_space<vmem>>, %arg5: memref<1x64x128xf32, #tpu.memory_space<vmem>>, %arg6: memref<1x64x128xf32, #tpu.memory_space<vmem>>, %arg7: memref<1x64x128xf32, #tpu.memory_space<vmem>>, %arg8: memref<1x128x128xf32, #tpu.memory_space<vmem>>) attributes {dimension_semantics = [#tpu.dimension_semantics<parallel>], iteration_bounds = array<i64: 2>, scalar_prefetch = 0 : i64, scratch_operands = 0 : i64, tpu.core_type = #tpu.core_type<tc>, window_params = [{pipeline_mode = #tpu.pipeline_mode<synchronous>, transform_indices = @transform_0, window_bounds = array<i64: 16, 64>}, {pipeline_mode = #tpu.pipeline_mode<synchronous>, transform_indices = @transform_1, window_bounds = array<i64: 16, 1>}, {pipeline_mode = #tpu.pipeline_mode<synchronous>, transform_indices = @transform_2, window_bounds = array<i64: 64, 64>}, {pipeline_mode = #tpu.pipeline_mode<synchronous>, transform_indices = @transform_3, window_bounds = array<i64: 64, 1>}, {transform_indices = @transform_4, window_bounds = array<i64: 1, 64, 128>}, {transform_indices = @transform_5, window_bounds = array<i64: 1, 64, 128>}, {transform_indices = @transform_6, window_bounds = array<i64: 1, 64, 128>}, {transform_indices = @transform_7, window_bounds = array<i64: 1, 128, 128>}]} {
    %c0 = arith.constant 0 : index
    %c0_0 = arith.constant 0 : index
    %c0_1 = arith.constant 0 : index
    %0 = vector.load %arg5[%c0, %c0_0, %c0_1] : memref<1x64x128xf32, #tpu.memory_space<vmem>>, vector<1x64x128xf32>
    %1 = vector.shape_cast %0 : vector<1x64x128xf32> to vector<64x128xf32>
    %c0_2 = arith.constant 0 : index
    %c0_3 = arith.constant 0 : index
    %2 = vector.load %arg1[%c0_2, %c0_3] : memref<16x64xf32, #tpu.memory_space<vmem>>, vector<16x64xf32>
    %cst = arith.constant dense<0.000000e+00> : vector<16x128xf32>
    %3 = tpu.matmul %2, %1, %cst {dimension_numbers = #tpu.dot_dimension_numbers<[1], [0], [0], [1], [0, 0, 1, 1], [], []>} : vector<16x64xf32>, vector<64x128xf32>, vector<16x128xf32> -> vector<16x128xf32>
    %c0_4 = arith.constant 0 : index
    %c0_5 = arith.constant 0 : index
    %4 = vector.load %arg2[%c0_4, %c0_5] : memref<16x1xf32, #tpu.memory_space<vmem>>, vector<16x1xf32>
    %5 = vector.broadcast %4 : vector<16x1xf32> to vector<16x128xf32>
    %6 = arith.addf %3, %5 : vector<16x128xf32>
    %7 = vector.extract_strided_slice %6 {offsets = [0, 0], sizes = [8, 128], strides = [1, 1]} : vector<16x128xf32> to vector<8x128xf32>
    %8 = vector.extract_strided_slice %6 {offsets = [8, 0], sizes = [8, 128], strides = [1, 1]} : vector<16x128xf32> to vector<8x128xf32>
    %c0_6 = arith.constant 0 : index
    %c0_7 = arith.constant 0 : index
    %9 = vector.load %arg3[%c0_6, %c0_7] : memref<64x64xf32, #tpu.memory_space<vmem>>, vector<64x64xf32>
    %cst_8 = arith.constant dense<0.000000e+00> : vector<64x128xf32>
    %10 = tpu.matmul %9, %1, %cst_8 {dimension_numbers = #tpu.dot_dimension_numbers<[1], [0], [0], [1], [0, 0, 1, 1], [], []>} : vector<64x64xf32>, vector<64x128xf32>, vector<64x128xf32> -> vector<64x128xf32>
    %c0_9 = arith.constant 0 : index
    %c0_10 = arith.constant 0 : index
    %11 = vector.load %arg4[%c0_9, %c0_10] : memref<64x1xf32, #tpu.memory_space<vmem>>, vector<64x1xf32>
    %12 = vector.broadcast %11 : vector<64x1xf32> to vector<64x128xf32>
    %13 = arith.addf %10, %12 : vector<64x128xf32>
    %c0_11 = arith.constant 0 : index
    %c0_12 = arith.constant 0 : index
    %c0_13 = arith.constant 0 : index
    %14 = vector.load %arg7[%c0_11, %c0_12, %c0_13] : memref<1x64x128xf32, #tpu.memory_space<vmem>>, vector<1x64x128xf32>
    %15 = vector.shape_cast %14 : vector<1x64x128xf32> to vector<64x128xf32>
    %16 = vector.shape_cast %13 : vector<64x128xf32> to vector<1x64x128xf32>
    tpu.vector_store %arg7[%c0_11, %c0_12, %c0_13], %16 {strides = array<i32>} : memref<1x64x128xf32, #tpu.memory_space<vmem>>, vector<1x64x128xf32>,
    %cst_14 = arith.constant dense<0.000000e+00> : vector<128x128xf32>
    %17 = tpu.matmul %7, %8, %cst_14 {dimension_numbers = #tpu.dot_dimension_numbers<[0], [0], [1], [1], [0, 1, 1, 1], [], []>} : vector<8x128xf32>, vector<8x128xf32>, vector<128x128xf32> -> vector<128x128xf32>
    %cst_15 = arith.constant dense<0xFF800000> : vector<128xf32>
    %18 = vector.multi_reduction <maximumf>, %17, %cst_15 [1] : vector<128x128xf32> to vector<128xf32>
    %19 = vector.shape_cast %18 : vector<128xf32> to vector<128x1xf32>
    %20 = vector.broadcast %19 : vector<128x1xf32> to vector<128x128xf32>
    %21 = arith.subf %17, %20 : vector<128x128xf32>
    %22 = math.exp %21 : vector<128x128xf32>
    %cst_16 = arith.constant dense<0.000000e+00> : vector<128xf32>
    %23 = vector.multi_reduction <add>, %22, %cst_16 [1] : vector<128x128xf32> to vector<128xf32>
    %24 = vector.shape_cast %23 : vector<128xf32> to vector<128x1xf32>
    %25 = tpu.reciprocal %24 : vector<128x1xf32> -> vector<128x1xf32>
    %26 = vector.broadcast %25 : vector<128x1xf32> to vector<128x128xf32>
    %27 = arith.mulf %22, %26 : vector<128x128xf32>
    %c0_17 = arith.constant 0 : index
    %c0_18 = arith.constant 0 : index
    %c0_19 = arith.constant 0 : index
    %28 = vector.load %arg8[%c0_17, %c0_18, %c0_19] : memref<1x128x128xf32, #tpu.memory_space<vmem>>, vector<1x128x128xf32>
    %29 = vector.shape_cast %28 : vector<1x128x128xf32> to vector<128x128xf32>
    %30 = vector.shape_cast %27 : vector<128x128xf32> to vector<1x128x128xf32>
    tpu.vector_store %arg8[%c0_17, %c0_18, %c0_19], %30 {strides = array<i32>} : memref<1x128x128xf32, #tpu.memory_space<vmem>>, vector<1x128x128xf32>,
    %cst_20 = arith.constant dense<0.000000e+00> : vector<64x128xf32>
    %31 = tpu.matmul %13, %27, %cst_20 {dimension_numbers = #tpu.dot_dimension_numbers<[1], [1], [0], [0], [0, 0, 1, 0], [], []>} : vector<64x128xf32>, vector<128x128xf32>, vector<64x128xf32> -> vector<64x128xf32>
    %c0_21 = arith.constant 0 : index
    %c0_22 = arith.constant 0 : index
    %c0_23 = arith.constant 0 : index
    %32 = vector.load %arg6[%c0_21, %c0_22, %c0_23] : memref<1x64x128xf32, #tpu.memory_space<vmem>>, vector<1x64x128xf32>
    %33 = vector.shape_cast %32 : vector<1x64x128xf32> to vector<64x128xf32>
    %34 = vector.shape_cast %31 : vector<64x128xf32> to vector<1x64x128xf32>
    tpu.vector_store %arg6[%c0_21, %c0_22, %c0_23], %34 {strides = array<i32>} : memref<1x64x128xf32, #tpu.memory_space<vmem>>, vector<1x64x128xf32>,
    return
  }
  func.func @transform_0(%arg0: i32) -> (i32, i32) {
    %c0_i32 = arith.constant 0 : i32
    %c0_i32_0 = arith.constant 0 : i32
    %c0_i32_1 = arith.constant 0 : i32
    return %c0_i32, %c0_i32_0 : i32, i32
  }
  func.func @transform_1(%arg0: i32) -> (i32, i32) {
    %c0_i32 = arith.constant 0 : i32
    %c0_i32_0 = arith.constant 0 : i32
    %c0_i32_1 = arith.constant 0 : i32
    return %c0_i32, %c0_i32_0 : i32, i32
  }
  func.func @transform_2(%arg0: i32) -> (i32, i32) {
    %c0_i32 = arith.constant 0 : i32
    %c0_i32_0 = arith.constant 0 : i32
    %c0_i32_1 = arith.constant 0 : i32
    return %c0_i32, %c0_i32_0 : i32, i32
  }
  func.func @transform_3(%arg0: i32) -> (i32, i32) {
    %c0_i32 = arith.constant 0 : i32
    %c0_i32_0 = arith.constant 0 : i32
    %c0_i32_1 = arith.constant 0 : i32
    return %c0_i32, %c0_i32_0 : i32, i32
  }
  func.func @transform_4(%arg0: i32) -> (i32, i32, i32) {
    %c0_i32 = arith.constant 0 : i32
    %c0_i32_0 = arith.constant 0 : i32
    %c0_i32_1 = arith.constant 0 : i32
    return %arg0, %c0_i32, %c0_i32_0 : i32, i32, i32
  }
  func.func @transform_5(%arg0: i32) -> (i32, i32, i32) {
    %c0_i32 = arith.constant 0 : i32
    %c0_i32_0 = arith.constant 0 : i32
    %c0_i32_1 = arith.constant 0 : i32
    return %arg0, %c0_i32, %c0_i32_0 : i32, i32, i32
  }
  func.func @transform_6(%arg0: i32) -> (i32, i32, i32) {
    %c0_i32 = arith.constant 0 : i32
    %c0_i32_0 = arith.constant 0 : i32
    %c0_i32_1 = arith.constant 0 : i32
    return %arg0, %c0_i32, %c0_i32_0 : i32, i32, i32
  }
  func.func @transform_7(%arg0: i32) -> (i32, i32, i32) {
    %c0_i32 = arith.constant 0 : i32
    %c0_i32_0 = arith.constant 0 : i32
    %c0_i32_1 = arith.constant 0 : i32
    return %arg0, %c0_i32, %c0_i32_0 : i32, i32, i32
  }
}

</mosaic_0001>

<llo_original>
// kernel: tpu_custom_call.1
$region0: #{tpu_custom_call.1}
  #allocation0 [shape = 'u32[]', space=smem, size = 0x4, offset = 0x4, fixed_abs, tag = 'smem constant byte address 0x4 - core index']
  #allocation1 [shape = 'u32[144,128]{1,0:T(1,128)}', space=vmem, size = 0x12000, scoped, tag = 'internal scratch']
  %s0 = inlined_call_operand.vmem [shape: f32[16,64], index: 0, kind: input, shape index: {}]
  %s1 = inlined_call_operand.vmem [shape: f32[16,1], index: 1, kind: input, shape index: {}]
  %s2 = inlined_call_operand.vmem [shape: f32[64,64], index: 2, kind: input, shape index: {}]
  %s3 = inlined_call_operand.vmem [shape: f32[64,1], index: 3, kind: input, shape index: {}]
  %s4 = inlined_call_operand.hbm [shape: f32[2,64,128], index: 4, kind: input, shape index: {}]
  %s5 = inlined_call_operand.hbm [shape: f32[2,64,128], index: 5, kind: output, shape index: {0}]
  %s6 = inlined_call_operand.hbm [shape: f32[2,64,128], index: 6, kind: output, shape index: {1}]
  %s7 = inlined_call_operand.hbm [shape: f32[2,128,128], index: 7, kind: output, shape index: {2}]
  %8 = xla_tuple %s5, %s6, %s7
  %s9 = sld [smem:[#allocation0]]
  $region73: #{tpu_custom_call.1} parent=0
    _
  %s11 = ssub.s32 1, %s9
  %s12 = scalar_select 0, %s11, %s9
  $region1: #{tpu_custom_call.1} parent=0
    #allocation2 [shape = 'u8[65536]{0}', space=vmem, size = 0x10000, scoped, tag = 'input window, operand 4']
    #allocation3 [shape = 's32[2]{0}', space=sflag, size = 0x8, scoped, tag = 'scoped memory for tpu_custom_call.1']
    #allocation4 [shape = 's32[2]{0}', space=sflag, size = 0x8, scoped, tag = 'scoped memory for tpu_custom_call.1']
    #allocation5 [shape = 'u8[65536]{0}', space=vmem, size = 0x10000, scoped, tag = 'output window, operand 0']
    #allocation6 [shape = 'u8[65536]{0}', space=vmem, size = 0x10000, scoped, tag = 'output window, operand 1']
    #allocation7 [shape = 's32[2]{0}', space=sflag, size = 0x8, scoped, tag = 'scoped memory for tpu_custom_call.1']
    #allocation8 [shape = 'u8[131072]{0}', space=vmem, size = 0x20000, scoped, tag = 'output window, operand 2']
    %13 = vsyncpa [#allocation3], 0
    %s14 = scalar_lea.sflag [#allocation3], 1
    %15 = vsyncpa %s14, 0
    %16 = vsyncpa [#allocation4], 0
    %s17 = scalar_lea.sflag [#allocation4], 1
    %18 = vsyncpa %s17, 0
    %19 = vsyncpa [#allocation7], 0
    %s20 = scalar_lea.sflag [#allocation7], 1
    %21 = vsyncpa %s20, 0
    loop: start=0, step=1, limit=4
    $region2: #{tpu_custom_call.1} parent=1 // loop_pre_header
      _
    $region3: #{tpu_custom_call.1} parent=1 // loop_header
      %s23 = sphi 0, %s27
      %p24 = scmp.ge.s32.totalorder %s23, 4
      %s31 = sphi 0, %s31
      %s33 = sphi 0, %s31
      %s34 = sphi 0, %s33
      %s48 = sphi 0, %s34
      %s52 = sphi 0, %s52
      %s54 = sphi 0, %s52
      %s55 = sphi 0, %s54
      %s69 = sphi 0, %s55
      %s73 = sphi 0, %s73
      %s75 = sphi 0, %s73
      %s76 = sphi 0, %s75
      %s90 = sphi 0, %s76
      %s94 = sphi 0, %s94
      %s96 = sphi 0, %s94
      %s97 = sphi 0, %s96
      %s111 = sphi 0, %s97
      %s117 = sphi 0, %s119
      %s120 = sphi 0, %s117
      %s121 = sphi 0, %s120
      %s137 = sphi 0, %s121
      %s143 = sphi 0, %s145
      %s146 = sphi 0, %s143
      %s147 = sphi 0, %s146
      %s163 = sphi 0, %s147
      %s169 = sphi 0, %s171
      %s172 = sphi 0, %s169
      %s173 = sphi 0, %s172
      %s189 = sphi 0, %s173
      %s195 = sphi 0, %s197
      %s198 = sphi 0, %s195
      %s199 = sphi 0, %s198
      %s215 = sphi 0, %s199
    $region4: #{tpu_custom_call.1} parent=1 // loop_header_branch
      %26 = sbr.rel (%p24) target = $region8
    $region5: #{tpu_custom_call.1} parent=1 // loop_body
      %s28 = ssub.s32 %s23, 1
      %s29 = ssub.s32 %s23, 2
      %s30 = sadd.s32 %s23, 1
      %s32 = sadd.s32 %s31, 1
      %p35 = scmp.eq.s32.totalorder %s23, 1
      %p36 = scmp.ne.s32.totalorder %s31, %s33
      %p37 = scmp.eq.s32.totalorder %s23, 0
      %p38 = por %p36, %p37
      %p39 = scmp.ne.s32.totalorder %s31, %s33
      %p40 = scmp.eq.s32.totalorder %s28, 1
      %p41 = por %p39, %p40
      %p42 = scmp.ne.s32.totalorder %s33, %s34
      %p43 = scmp.eq.s32.totalorder %s28, 0
      %p44 = por %p42, %p43
      %p45 = scmp.ne.s32.totalorder %s33, %s34
      %p46 = scmp.eq.s32.totalorder %s29, 1
      %p47 = por %p45, %p46
      %p49 = scmp.ne.s32.totalorder %s34, %s48
      %p50 = scmp.eq.s32.totalorder %s29, 0
      %p51 = por %p49, %p50
      %s53 = sadd.s32 %s52, 1
      %p56 = scmp.eq.s32.totalorder %s23, 1
      %p57 = scmp.ne.s32.totalorder %s52, %s54
      %p58 = scmp.eq.s32.totalorder %s23, 0
      %p59 = por %p57, %p58
      %p60 = scmp.ne.s32.totalorder %s52, %s54
      %p61 = scmp.eq.s32.totalorder %s28, 1
      %p62 = por %p60, %p61
      %p63 = scmp.ne.s32.totalorder %s54, %s55
      %p64 = scmp.eq.s32.totalorder %s28, 0
      %p65 = por %p63, %p64
      %p66 = scmp.ne.s32.totalorder %s54, %s55
      %p67 = scmp.eq.s32.totalorder %s29, 1
      %p68 = por %p66, %p67
      %p70 = scmp.ne.s32.totalorder %s55, %s69
      %p71 = scmp.eq.s32.totalorder %s29, 0
      %p72 = por %p70, %p71
      %s74 = sadd.s32 %s73, 1
      %p77 = scmp.eq.s32.totalorder %s23, 1
      %p78 = scmp.ne.s32.totalorder %s73, %s75
      %p79 = scmp.eq.s32.totalorder %s23, 0
      %p80 = por %p78, %p79
      %p81 = scmp.ne.s32.totalorder %s73, %s75
      %p82 = scmp.eq.s32.totalorder %s28, 1
      %p83 = por %p81, %p82
      %p84 = scmp.ne.s32.totalorder %s75, %s76
      %p85 = scmp.eq.s32.totalorder %s28, 0
      %p86 = por %p84, %p85
      %p87 = scmp.ne.s32.totalorder %s75, %s76
      %p88 = scmp.eq.s32.totalorder %s29, 1
      %p89 = por %p87, %p88
      %p91 = scmp.ne.s32.totalorder %s76, %s90
      %p92 = scmp.eq.s32.totalorder %s29, 0
      %p93 = por %p91, %p92
      %s95 = sadd.s32 %s94, 1
      %p98 = scmp.eq.s32.totalorder %s23, 1
      %p99 = scmp.ne.s32.totalorder %s94, %s96
      %p100 = scmp.eq.s32.totalorder %s23, 0
      %p101 = por %p99, %p100
      %p102 = scmp.ne.s32.totalorder %s94, %s96
      %p103 = scmp.eq.s32.totalorder %s28, 1
      %p104 = por %p102, %p103
      %p105 = scmp.ne.s32.totalorder %s96, %s97
      %p106 = scmp.eq.s32.totalorder %s28, 0
      %p107 = por %p105, %p106
      %p108 = scmp.ne.s32.totalorder %s96, %s97
      %p109 = scmp.eq.s32.totalorder %s29, 1
      %p110 = por %p108, %p109
      %p112 = scmp.ne.s32.totalorder %s97, %s111
      %p113 = scmp.eq.s32.totalorder %s29, 0
      %p114 = por %p112, %p113
      %s115 = ssub.s32 %s23, %s30
      %p116 = scmp.eq.s32.totalorder %s115, 0
      %s118 = sadd.s32 %s117, 1
      %s119 = scalar_select %p116, %s117, %s118
      %p122 = pneg %p116
      %p123 = scmp.eq.s32.totalorder %s23, 1
      %p124 = por %p122, %p123
      %p125 = scmp.ne.s32.totalorder %s117, %s120
      %p126 = scmp.eq.s32.totalorder %s23, 0
      %p127 = por %p125, %p126
      %p128 = scmp.ne.s32.totalorder %s117, %s120
      %p129 = scmp.eq.s32.totalorder %s28, 1
      %p130 = por %p128, %p129
      %p131 = scmp.ne.s32.totalorder %s120, %s121
      %p132 = scmp.eq.s32.totalorder %s28, 0
      %p133 = por %p131, %p132
      %p134 = scmp.ne.s32.totalorder %s120, %s121
      %p135 = scmp.eq.s32.totalorder %s29, 1
      %p136 = por %p134, %p135
      %p138 = scmp.ne.s32.totalorder %s121, %s137
      %p139 = scmp.eq.s32.totalorder %s29, 0
      %p140 = por %p138, %p139
      %s141 = ssub.s32 %s23, %s30
      %p142 = scmp.eq.s32.totalorder %s141, 0
      %s144 = sadd.s32 %s143, 1
      %s145 = scalar_select %p142, %s143, %s144
      %p148 = pneg %p142
      %p149 = scmp.eq.s32.totalorder %s23, 1
      %p150 = por %p148, %p149
      %p151 = scmp.ne.s32.totalorder %s143, %s146
      %p152 = scmp.eq.s32.totalorder %s23, 0
      %p153 = por %p151, %p152
      %p154 = scmp.ne.s32.totalorder %s143, %s146
      %p155 = scmp.eq.s32.totalorder %s28, 1
      %p156 = por %p154, %p155
      %p157 = scmp.ne.s32.totalorder %s146, %s147
      %p158 = scmp.eq.s32.totalorder %s28, 0
      %p159 = por %p157, %p158
      %p160 = scmp.ne.s32.totalorder %s146, %s147
      %p161 = scmp.eq.s32.totalorder %s29, 1
      %p162 = por %p160, %p161
      %p164 = scmp.ne.s32.totalorder %s147, %s163
      %p165 = scmp.eq.s32.totalorder %s29, 0
      %p166 = por %p164, %p165
      %s167 = ssub.s32 %s23, %s30
      %p168 = scmp.eq.s32.totalorder %s167, 0
      %s170 = sadd.s32 %s169, 1
      %s171 = scalar_select %p168, %s169, %s170
      %p174 = pneg %p168
      %p175 = scmp.eq.s32.totalorder %s23, 1
      %p176 = por %p174, %p175
      %p177 = scmp.ne.s32.totalorder %s169, %s172
      %p178 = scmp.eq.s32.totalorder %s23, 0
      %p179 = por %p177, %p178
      %p180 = scmp.ne.s32.totalorder %s169, %s172
      %p181 = scmp.eq.s32.totalorder %s28, 1
      %p182 = por %p180, %p181
      %p183 = scmp.ne.s32.totalorder %s172, %s173
      %p184 = scmp.eq.s32.totalorder %s28, 0
      %p185 = por %p183, %p184
      %p186 = scmp.ne.s32.totalorder %s172, %s173
      %p187 = scmp.eq.s32.totalorder %s29, 1
      %p188 = por %p186, %p187
      %p190 = scmp.ne.s32.totalorder %s173, %s189
      %p191 = scmp.eq.s32.totalorder %s29, 0
      %p192 = por %p190, %p191
      %s193 = ssub.s32 %s23, %s30
      %p194 = scmp.eq.s32.totalorder %s193, 0
      %s196 = sadd.s32 %s195, 1
      %s197 = scalar_select %p194, %s195, %s196
      %p200 = pneg %p194
      %p201 = scmp.eq.s32.totalorder %s23, 1
      %p202 = por %p200, %p201
      %p203 = scmp.ne.s32.totalorder %s195, %s198
      %p204 = scmp.eq.s32.totalorder %s23, 0
      %p205 = por %p203, %p204
      %p206 = scmp.ne.s32.totalorder %s195, %s198
      %p207 = scmp.eq.s32.totalorder %s28, 1
      %p208 = por %p206, %p207
      %p209 = scmp.ne.s32.totalorder %s198, %s199
      %p210 = scmp.eq.s32.totalorder %s28, 0
      %p211 = por %p209, %p210
      %p212 = scmp.ne.s32.totalorder %s198, %s199
      %p213 = scmp.eq.s32.totalorder %s29, 1
      %p214 = por %p212, %p213
      %p216 = scmp.ne.s32.totalorder %s199, %s215
      %p217 = scmp.eq.s32.totalorder %s29, 0
      %p218 = por %p216, %p217
      %p219 = scmp.le.s32.totalorder 1, %s23
      %p220 = scmp.lt.s32.totalorder %s23, 3
      %p221 = pnand %p219, %p220
      %p222 = pneg %p221
      // Predicated region
      $region9: #{tpu_custom_call.1} parent=5 // pred_check
        _
      $region10: #{tpu_custom_call.1} parent=5 // pred_check_branch
        %224 = sbr.rel (%p221) target = $region12
      $region11: #{tpu_custom_call.1} parent=5 // pred_region
        %s225 = ssub.s32 %s23, 1
        // Predicated region
        $region13: #{tpu_custom_call.1} parent=11 // pred_check
          %p226 = pneg %p44
        $region14: #{tpu_custom_call.1} parent=11 // pred_check_branch
          %228 = sbr.rel (%p226) target = $region16
        $region15: #{tpu_custom_call.1} parent=11 // pred_region
          _
        $region16: #{tpu_custom_call.1} parent=11 // pred_fallthru
          _
        // Predicated region
        $region17: #{tpu_custom_call.1} parent=11 // pred_check
          %p229 = pneg %p65
        $region18: #{tpu_custom_call.1} parent=11 // pred_check_branch
          %231 = sbr.rel (%p229) target = $region20
        $region19: #{tpu_custom_call.1} parent=11 // pred_region
          _
        $region20: #{tpu_custom_call.1} parent=11 // pred_fallthru
          _
        // Predicated region
        $region21: #{tpu_custom_call.1} parent=11 // pred_check
          %p232 = pneg %p86
        $region22: #{tpu_custom_call.1} parent=11 // pred_check_branch
          %234 = sbr.rel (%p232) target = $region24
        $region23: #{tpu_custom_call.1} parent=11 // pred_region
          _
        $region24: #{tpu_custom_call.1} parent=11 // pred_fallthru
          _
        // Predicated region
        $region25: #{tpu_custom_call.1} parent=11 // pred_check
          %p235 = pneg %p107
        $region26: #{tpu_custom_call.1} parent=11 // pred_check_branch
          %237 = sbr.rel (%p235) target = $region28
        $region27: #{tpu_custom_call.1} parent=11 // pred_region
          _
        $region28: #{tpu_custom_call.1} parent=11 // pred_fallthru
          _
      $region12: #{tpu_custom_call.1} parent=5 // pred_fallthru
        _
      %p238 = scmp.lt.s32.totalorder %s23, 2
      // Predicated region
      $region29: #{tpu_custom_call.1} parent=5 // pred_check
        %p239 = pneg %p238
      $region30: #{tpu_custom_call.1} parent=5 // pred_check_branch
        %241 = sbr.rel (%p239) target = $region32
      $region31: #{tpu_custom_call.1} parent=5 // pred_region
        // Predicated region
        $region33: #{tpu_custom_call.1} parent=31 // pred_check
          %p242 = pneg %p127
        $region34: #{tpu_custom_call.1} parent=31 // pred_check_branch
          %244 = sbr.rel (%p242) target = $region36
        $region35: #{tpu_custom_call.1} parent=31 // pred_region
          %s245 = sand.u32 %s117, 1
          %s246 = scalar_lea.sflag [#allocation3], %s245
          %s247 = sand.u32 %s117, 1
          %s248 = smul.addr %s247, 64
          %s249 = scalar_lea.vmem [#allocation2], %s248
          %s251 = ssub.s32 1024, 1024
          %252 = vsyncadd %s246, %s251
          %s253 = smul.addr %s23, 8
          %s254 = smul.addr %s253, 128
          %s255 = scalar_lea.hbm %s4, %s254
          %s256 = sshll.u32 %s249, 4
          %s257 = int_to_ptr.vmem [resolvable:$true] %s256
          %262 = dma.hbm_to_vmem [thread:$0]  %s255, 1024, %s257, %s246, 128, 128, 8
        $region36: #{tpu_custom_call.1} parent=31 // pred_fallthru
          _
      $region32: #{tpu_custom_call.1} parent=5 // pred_fallthru
        _
      %p263 = scmp.le.s32.totalorder 1, %s23
      %p264 = scmp.lt.s32.totalorder %s23, 3
      %p265 = pnand %p263, %p264
      %p266 = pneg %p265
      // Predicated region
      $region37: #{tpu_custom_call.1} parent=5 // pred_check
        _
      $region38: #{tpu_custom_call.1} parent=5 // pred_check_branch
        %268 = sbr.rel (%p265) target = $region40
      $region39: #{tpu_custom_call.1} parent=5 // pred_region
        %s269 = ssub.s32 %s23, 1
        %s270 = sand.u32 %s120, 1
        %s271 = scalar_lea.sflag [#allocation3], %s270
        %s272 = sand.u32 %s120, 1
        %s273 = smul.addr %s272, 64
        %s274 = scalar_lea.vmem [#allocation2], %s273
        // Predicated region
        $region41: #{tpu_custom_call.1} parent=39 // pred_check
          %p275 = pneg %p133
        $region42: #{tpu_custom_call.1} parent=39 // pred_check_branch
          %277 = sbr.rel (%p275) target = $region44
        $region43: #{tpu_custom_call.1} parent=39 // pred_region
          %278 = dma.done %s271, 1024
        $region44: #{tpu_custom_call.1} parent=39 // pred_fallthru
          _
        %p279 = pneg %p44
        %p280 = pneg %p41
        %p281 = pneg %p65
        %p282 = pneg %p62
        %p283 = pneg %p86
        %p284 = pneg %p83
        %p285 = pneg %p107
        %p286 = pneg %p104
        %s287 = sand.u32 %s120, 1
        %s288 = scalar_lea.sflag [#allocation3], %s287
        %s289 = sand.u32 %s120, 1
        %s290 = smul.addr %s289, 64
        %s291 = scalar_lea.vmem [#allocation2], %s290
        %p292 = pneg %p133
        %p293 = pneg %p130
        %p294 = pneg %p159
        %p295 = pneg %p156
        %s296 = sand.u32 %s146, 1
        %s297 = scalar_lea.sflag [#allocation4], %s296
        %s298 = sand.u32 %s146, 1
        %s299 = smul.addr %s298, 64
        %s300 = scalar_lea.vmem [#allocation5], %s299
        %p301 = pneg %p185
        %p302 = pneg %p182
        %s303 = sand.u32 %s28, 1
        %s304 = scalar_lea.sflag [#allocation7], %s303
        %s305 = sand.u32 %s172, 1
        %s306 = smul.addr %s305, 64
        %s307 = scalar_lea.vmem [#allocation6], %s306
        %p308 = pneg %p211
        %p309 = pneg %p208
        %s310 = sand.u32 %s28, 1
        %s311 = scalar_lea.sflag [#allocation7], %s310
        %s312 = sand.u32 %s198, 1
        %s313 = smul.addr %s312, 128
        %s314 = scalar_lea.vmem [#allocation8], %s313
        %v315 = vld [vmem:[%s274] sm:$0xff]
        %v316 = vld [vmem:[%s274 + $0x8] sm:$0xff]
        %v317 = vld [vmem:[%s274 + $0x10] sm:$0xff]
        %v318 = vld [vmem:[%s274 + $0x18] sm:$0xff]
        %v319 = vld [vmem:[%s274 + $0x20] sm:$0xff]
        %v320 = vld [vmem:[%s274 + $0x28] sm:$0xff]
        %v321 = vld [vmem:[%s274 + $0x30] sm:$0xff]
        %v322 = vld [vmem:[%s274 + $0x38] sm:$0xff]
        %v323 = vld [vmem:[%s0] sm:$0xff]
        %v324 = vld [vmem:[%s0 + $0x8] sm:$0xff]
        %v325 = vld [vmem:[%s1] sm:$0xff]
        %v326 = vld [vmem:[%s1 + $0x8] sm:$0xff]
        %328 = vset.pattern.permute.xlu0 0
        %329 = vperm.xlu0 %328, %v325
        %v330 = vpop.permute.xlu0 %329
        %333 = vset.pattern.permute.xlu0 0
        %334 = vperm.xlu0 %333, %v326
        %v335 = vpop.permute.xlu0 %334
        %vm337 = vcmask 523264
        %v339 = vsel %vm337, %v323, 0
        %v342 = vsel %vm337, %v324, 0
        %344 = vmatprep.subr.mxu0 0.0
        %345 = vmatpush1.msra.mxu0 %v315
        %346 = vmatprep.subr.mxu0 0.0
        %347 = vmatpush1.msra.mxu0 %v316
        %348 = vmatprep.subr.mxu0 0.0
        %349 = vmatpush1.msra.mxu0 %v317
        %350 = vmatprep.subr.mxu0 0.0
        %351 = vmatpush1.msra.mxu0 %v318
        %352 = vmatprep.subr.mxu0 0.0
        %353 = vmatpush1.msra.mxu0 %v319
        %354 = vmatprep.subr.mxu0 0.0
        %355 = vmatpush1.msra.mxu0 %v320
        %356 = vmatprep.subr.mxu0 0.0
        %357 = vmatpush1.msra.mxu0 %v321
        %358 = vmatprep.subr.mxu0 0.0
        %359 = vmatpush1.msra.mxu0 %v322
        %360 = vmatprep.subr.mxu0 0.0
        %361 = vmatpush1.msra.mxu0 0.0
        %362 = vmatprep.subr.mxu0 0.0
        %363 = vmatpush1.msra.mxu0 0.0
        %364 = vmatprep.subr.mxu0 0.0
        %365 = vmatpush1.msra.mxu0 0.0
        %366 = vmatprep.subr.mxu0 0.0
        %367 = vmatpush1.msra.mxu0 0.0
        %368 = vmatprep.subr.mxu0 0.0
        %369 = vmatpush1.msra.mxu0 0.0
        %370 = vmatprep.subr.mxu0 0.0
        %371 = vmatpush1.msra.mxu0 0.0
        %372 = vmatprep.subr.mxu0 0.0
        %373 = vmatpush1.msra.mxu0 0.0
        %374 = vmatprep.subr.mxu0 0.0
        %375 = vmatpush1.msra.mxu0 0.0
        %376 = vmatprep.subr.mxu0 0.0
        %377 = vmatpush1.msra.mxu0 0.0
        %378 = vmatprep.subr.mxu0 0.0
        %379 = vmatpush1.msra.mxu0 0.0
        %380 = vmatprep.subr.mxu0 0.0
        %381 = vmatpush1.msra.mxu0 0.0
        %382 = vmatprep.subr.mxu0 0.0
        %383 = vmatpush1.msra.mxu0 0.0
        %384 = vmatprep.subr.mxu0 0.0
        %385 = vmatpush1.msra.mxu0 0.0
        %386 = vmatprep.subr.mxu0 0.0
        %387 = vmatpush1.msra.mxu0 0.0
        %388 = vmatprep.subr.mxu0 0.0
        %389 = vmatpush1.msra.mxu0 0.0
        %390 = vmatprep.subr.mxu0 0.0
        %391 = vmatpush1.msra.mxu0 0.0
        %392 = vmatprep.subr.mxu0 0.0
        %393 = vmatpush1.msra.mxu0 0.0
        %394 = vmatprep.subr.mxu0 0.0
        %395 = vmatpush1.msra.mxu0 0.0
        %396 = vmatprep.subr.mxu0 0.0
        %397 = vmatpush1.msra.mxu0 0.0
        %398 = vmatprep.subr.mxu0 0.0
        %399 = vmatpush1.msra.mxu0 0.0
        %400 = vmatprep.subr.mxu0 0.0
        %401 = vmatpush1.msra.mxu0 0.0
        %402 = vmatprep.subr.mxu0 0.0
        %403 = vmatpush1.msra.mxu0 0.0
        %404 = vmatprep.subr.mxu0 0.0
        %405 = vmatpush1.msra.mxu0 0.0
        %406 = vmatprep.subr.mxu0 0.0
        %407 = vmatpush1.msra.mxu0 0.0
        %408 = vmatprep.mubr.f32.mxu0 0.0
        %409 = vmatmul.mubr.f32.gmra.mrb[0].mxu0 %v339
        %v410 = vpop.f32.mrb[0].mxu0
        %v411 = vadd.f32 %v330, %v410
        %v412 = vpop.f32.mrb[0].mxu0
        %413 = vmatprep.mubr.f32.mxu0 0.0
        %414 = vmatmul.mubr.f32.gmra.mrb[0].mxu0 %v342
        %v415 = vpop.f32.mrb[0].mxu0
        %v416 = vadd.f32 %v335, %v415
        %v417 = vpop.f32.mrb[0].mxu0
        %418 = vdwg.mxu0
        %v419 = vld [vmem:[%s2] sm:$0xff]
        %v420 = vld [vmem:[%s2 + $0x8] sm:$0xff]
        %v421 = vld [vmem:[%s2 + $0x10] sm:$0xff]
        %v422 = vld [vmem:[%s2 + $0x18] sm:$0xff]
        %v423 = vld [vmem:[%s2 + $0x20] sm:$0xff]
        %v424 = vld [vmem:[%s2 + $0x28] sm:$0xff]
        %v425 = vld [vmem:[%s2 + $0x30] sm:$0xff]
        %v426 = vld [vmem:[%s2 + $0x38] sm:$0xff]
        %v427 = vld [vmem:[%s3] sm:$0xff]
        %v428 = vld [vmem:[%s3 + $0x8] sm:$0xff]
        %v429 = vld [vmem:[%s3 + $0x10] sm:$0xff]
        %v430 = vld [vmem:[%s3 + $0x18] sm:$0xff]
        %v431 = vld [vmem:[%s3 + $0x20] sm:$0xff]
        %v432 = vld [vmem:[%s3 + $0x28] sm:$0xff]
        %v433 = vld [vmem:[%s3 + $0x30] sm:$0xff]
        %v434 = vld [vmem:[%s3 + $0x38] sm:$0xff]
        %436 = vset.pattern.permute.xlu0 0
        %437 = vperm.xlu0 %436, %v427
        %v438 = vpop.permute.xlu0 %437
        %441 = vset.pattern.permute.xlu0 0
        %442 = vperm.xlu0 %441, %v428
        %v443 = vpop.permute.xlu0 %442
        %446 = vset.pattern.permute.xlu0 0
        %447 = vperm.xlu0 %446, %v429
        %v448 = vpop.permute.xlu0 %447
        %451 = vset.pattern.permute.xlu0 0
        %452 = vperm.xlu0 %451, %v430
        %v453 = vpop.permute.xlu0 %452
        %456 = vset.pattern.permute.xlu0 0
        %457 = vperm.xlu0 %456, %v431
        %v458 = vpop.permute.xlu0 %457
        %461 = vset.pattern.permute.xlu0 0
        %462 = vperm.xlu0 %461, %v432
        %v463 = vpop.permute.xlu0 %462
        %466 = vset.pattern.permute.xlu0 0
        %467 = vperm.xlu0 %466, %v433
        %v468 = vpop.permute.xlu0 %467
        %471 = vset.pattern.permute.xlu0 0
        %472 = vperm.xlu0 %471, %v434
        %v473 = vpop.permute.xlu0 %472
        %v476 = vsel %vm337, %v419, 0
        %v479 = vsel %vm337, %v420, 0
        %v482 = vsel %vm337, %v421, 0
        %v485 = vsel %vm337, %v422, 0
        %v488 = vsel %vm337, %v423, 0
        %v491 = vsel %vm337, %v424, 0
        %v494 = vsel %vm337, %v425, 0
        %v497 = vsel %vm337, %v426, 0
        %499 = vmatprep.subr.mxu0 0.0
        %500 = vmatpush1.msra.mxu0 %v315
        %501 = vmatprep.subr.mxu0 0.0
        %502 = vmatpush1.msra.mxu0 %v316
        %503 = vmatprep.subr.mxu0 0.0
        %504 = vmatpush1.msra.mxu0 %v317
        %505 = vmatprep.subr.mxu0 0.0
        %506 = vmatpush1.msra.mxu0 %v318
        %507 = vmatprep.subr.mxu0 0.0
        %508 = vmatpush1.msra.mxu0 %v319
        %509 = vmatprep.subr.mxu0 0.0
        %510 = vmatpush1.msra.mxu0 %v320
        %511 = vmatprep.subr.mxu0 0.0
        %512 = vmatpush1.msra.mxu0 %v321
        %513 = vmatprep.subr.mxu0 0.0
        %514 = vmatpush1.msra.mxu0 %v322
        %515 = vmatprep.subr.mxu0 0.0
        %516 = vmatpush1.msra.mxu0 0.0
        %517 = vmatprep.subr.mxu0 0.0
        %518 = vmatpush1.msra.mxu0 0.0
        %519 = vmatprep.subr.mxu0 0.0
        %520 = vmatpush1.msra.mxu0 0.0
        %521 = vmatprep.subr.mxu0 0.0
        %522 = vmatpush1.msra.mxu0 0.0
        %523 = vmatprep.subr.mxu0 0.0
        %524 = vmatpush1.msra.mxu0 0.0
        %525 = vmatprep.subr.mxu0 0.0
        %526 = vmatpush1.msra.mxu0 0.0
        %527 = vmatprep.subr.mxu0 0.0
        %528 = vmatpush1.msra.mxu0 0.0
        %529 = vmatprep.subr.mxu0 0.0
        %530 = vmatpush1.msra.mxu0 0.0
        %531 = vmatprep.subr.mxu0 0.0
        %532 = vmatpush1.msra.mxu0 0.0
        %533 = vmatprep.subr.mxu0 0.0
        %534 = vmatpush1.msra.mxu0 0.0
        %535 = vmatprep.subr.mxu0 0.0
        %536 = vmatpush1.msra.mxu0 0.0
        %537 = vmatprep.subr.mxu0 0.0
        %538 = vmatpush1.msra.mxu0 0.0
        %539 = vmatprep.subr.mxu0 0.0
        %540 = vmatpush1.msra.mxu0 0.0
        %541 = vmatprep.subr.mxu0 0.0
        %542 = vmatpush1.msra.mxu0 0.0
        %543 = vmatprep.subr.mxu0 0.0
        %544 = vmatpush1.msra.mxu0 0.0
        %545 = vmatprep.subr.mxu0 0.0
        %546 = vmatpush1.msra.mxu0 0.0
        %547 = vmatprep.subr.mxu0 0.0
        %548 = vmatpush1.msra.mxu0 0.0
        %549 = vmatprep.subr.mxu0 0.0
        %550 = vmatpush1.msra.mxu0 0.0
        %551 = vmatprep.subr.mxu0 0.0
        %552 = vmatpush1.msra.mxu0 0.0
        %553 = vmatprep.subr.mxu0 0.0
        %554 = vmatpush1.msra.mxu0 0.0
        %555 = vmatprep.subr.mxu0 0.0
        %556 = vmatpush1.msra.mxu0 0.0
        %557 = vmatprep.subr.mxu0 0.0
        %558 = vmatpush1.msra.mxu0 0.0
        %559 = vmatprep.subr.mxu0 0.0
        %560 = vmatpush1.msra.mxu0 0.0
        %561 = vmatprep.subr.mxu0 0.0
        %562 = vmatpush1.msra.mxu0 0.0
        %563 = vmatprep.mubr.f32.mxu0 0.0
        %564 = vmatmul.mubr.f32.gmra.mrb[0].mxu0 %v476
        %v565 = vpop.f32.mrb[0].mxu0
        %v566 = vadd.f32 %v438, %v565
        %v567 = vpop.f32.mrb[0].mxu0
        %568 = vmatprep.mubr.f32.mxu0 0.0
        %569 = vmatmul.mubr.f32.gmra.mrb[0].mxu0 %v479
        %v570 = vpop.f32.mrb[0].mxu0
        %v571 = vadd.f32 %v443, %v570
        %v572 = vpop.f32.mrb[0].mxu0
        %573 = vmatprep.mubr.f32.mxu0 0.0
        %574 = vmatmul.mubr.f32.gmra.mrb[0].mxu0 %v482
        %v575 = vpop.f32.mrb[0].mxu0
        %v576 = vadd.f32 %v448, %v575
        %v577 = vpop.f32.mrb[0].mxu0
        %578 = vmatprep.mubr.f32.mxu0 0.0
        %579 = vmatmul.mubr.f32.gmra.mrb[0].mxu0 %v485
        %v580 = vpop.f32.mrb[0].mxu0
        %v581 = vadd.f32 %v453, %v580
        %v582 = vpop.f32.mrb[0].mxu0
        %583 = vmatprep.mubr.f32.mxu0 0.0
        %584 = vmatmul.mubr.f32.gmra.mrb[0].mxu0 %v488
        %v585 = vpop.f32.mrb[0].mxu0
        %v586 = vadd.f32 %v458, %v585
        %v587 = vpop.f32.mrb[0].mxu0
        %588 = vmatprep.mubr.f32.mxu0 0.0
        %589 = vmatmul.mubr.f32.gmra.mrb[0].mxu0 %v491
        %v590 = vpop.f32.mrb[0].mxu0
        %v591 = vadd.f32 %v463, %v590
        %v592 = vpop.f32.mrb[0].mxu0
        %593 = vmatprep.mubr.f32.mxu0 0.0
        %594 = vmatmul.mubr.f32.gmra.mrb[0].mxu0 %v494
        %v595 = vpop.f32.mrb[0].mxu0
        %v596 = vadd.f32 %v468, %v595
        %v597 = vpop.f32.mrb[0].mxu0
        %598 = vmatprep.mubr.f32.mxu0 0.0
        %599 = vmatmul.mubr.f32.gmra.mrb[0].mxu0 %v497
        %v600 = vpop.f32.mrb[0].mxu0
        %v601 = vadd.f32 %v473, %v600
        %v602 = vpop.f32.mrb[0].mxu0
        %603 = vdwg.mxu0
        %604 = vst [vmem:[%s307] sm:$0xff] %v566
        %605 = vst [vmem:[%s307 + $0x8] sm:$0xff] %v571
        %606 = vst [vmem:[%s307 + $0x10] sm:$0xff] %v576
        %607 = vst [vmem:[%s307 + $0x18] sm:$0xff] %v581
        %608 = vst [vmem:[%s307 + $0x20] sm:$0xff] %v586
        %609 = vst [vmem:[%s307 + $0x28] sm:$0xff] %v591
        %610 = vst [vmem:[%s307 + $0x30] sm:$0xff] %v596
        %611 = vst [vmem:[%s307 + $0x38] sm:$0xff] %v601
        %612 = vxpose.xlu0.b32.start [1/16] %v411, 128
        %613 = vxpose.xlu0.b32.cont [2/16] 0.0, 128
        %614 = vxpose.xlu0.b32.cont [3/16] 0.0, 128
        %615 = vxpose.xlu0.b32.cont [4/16] 0.0, 128
        %616 = vxpose.xlu0.b32.cont [5/16] 0.0, 128
        %617 = vxpose.xlu0.b32.cont [6/16] 0.0, 128
        %618 = vxpose.xlu0.b32.cont [7/16] 0.0, 128
        %619 = vxpose.xlu0.b32.cont [8/16] 0.0, 128
        %620 = vxpose.xlu0.b32.cont [9/16] 0.0, 128
        %621 = vxpose.xlu0.b32.cont [10/16] 0.0, 128
        %622 = vxpose.xlu0.b32.cont [11/16] 0.0, 128
        %623 = vxpose.xlu0.b32.cont [12/16] 0.0, 128
        %624 = vxpose.xlu0.b32.cont [13/16] 0.0, 128
        %625 = vxpose.xlu0.b32.cont [14/16] 0.0, 128
        %626 = vxpose.xlu0.b32.cont [15/16] 0.0, 128
        %627 = vxpose.xlu0.b32.end [16/16] 0.0, 128
        %v628 = vpop.trf.xlu0
        %v629 = vpop.trf.xlu0
        %v630 = vpop.trf.xlu0
        %v631 = vpop.trf.xlu0
        %v632 = vpop.trf.xlu0
        %v633 = vpop.trf.xlu0
        %v634 = vpop.trf.xlu0
        %v635 = vpop.trf.xlu0
        %v636 = vpop.trf.xlu0
        %v637 = vpop.trf.xlu0
        %v638 = vpop.trf.xlu0
        %v639 = vpop.trf.xlu0
        %v640 = vpop.trf.xlu0
        %v641 = vpop.trf.xlu0
        %v642 = vpop.trf.xlu0
        %v643 = vpop.trf.xlu0
        %vm644 = vcmask 64512
        %v646 = vsel %vm644, %v628, 0
        %v649 = vsel %vm644, %v629, 0
        %v652 = vsel %vm644, %v630, 0
        %v655 = vsel %vm644, %v631, 0
        %v658 = vsel %vm644, %v632, 0
        %v661 = vsel %vm644, %v633, 0
        %v664 = vsel %vm644, %v634, 0
        %v667 = vsel %vm644, %v635, 0
        %v670 = vsel %vm644, %v636, 0
        %v673 = vsel %vm644, %v637, 0
        %v676 = vsel %vm644, %v638, 0
        %v679 = vsel %vm644, %v639, 0
        %v682 = vsel %vm644, %v640, 0
        %v685 = vsel %vm644, %v641, 0
        %v688 = vsel %vm644, %v642, 0
        %v691 = vsel %vm644, %v643, 0
        %693 = vmatprep.subr.mxu0 0.0
        %694 = vmatpush1.msra.mxu0 %v416
        %695 = vmatprep.subr.mxu0 0.0
        %696 = vmatpush1.msra.mxu0 0.0
        %697 = vmatprep.subr.mxu0 0.0
        %698 = vmatpush1.msra.mxu0 0.0
        %699 = vmatprep.subr.mxu0 0.0
        %700 = vmatpush1.msra.mxu0 0.0
        %701 = vmatprep.subr.mxu0 0.0
        %702 = vmatpush1.msra.mxu0 0.0
        %703 = vmatprep.subr.mxu0 0.0
        %704 = vmatpush1.msra.mxu0 0.0
        %705 = vmatprep.subr.mxu0 0.0
        %706 = vmatpush1.msra.mxu0 0.0
        %707 = vmatprep.subr.mxu0 0.0
        %708 = vmatpush1.msra.mxu0 0.0
        %709 = vmatprep.subr.mxu0 0.0
        %710 = vmatpush1.msra.mxu0 0.0
        %711 = vmatprep.subr.mxu0 0.0
        %712 = vmatpush1.msra.mxu0 0.0
        %713 = vmatprep.subr.mxu0 0.0
        %714 = vmatpush1.msra.mxu0 0.0
        %715 = vmatprep.subr.mxu0 0.0
        %716 = vmatpush1.msra.mxu0 0.0
        %717 = vmatprep.subr.mxu0 0.0
        %718 = vmatpush1.msra.mxu0 0.0
        %719 = vmatprep.subr.mxu0 0.0
        %720 = vmatpush1.msra.mxu0 0.0
        %721 = vmatprep.subr.mxu0 0.0
        %722 = vmatpush1.msra.mxu0 0.0
        %723 = vmatprep.subr.mxu0 0.0
        %724 = vmatpush1.msra.mxu0 0.0
        %725 = vmatprep.subr.mxu0 0.0
        %726 = vmatpush1.msra.mxu0 0.0
        %727 = vmatprep.subr.mxu0 0.0
        %728 = vmatpush1.msra.mxu0 0.0
        %729 = vmatprep.subr.mxu0 0.0
        %730 = vmatpush1.msra.mxu0 0.0
        %731 = vmatprep.subr.mxu0 0.0
        %732 = vmatpush1.msra.mxu0 0.0
        %733 = vmatprep.subr.mxu0 0.0
        %734 = vmatpush1.msra.mxu0 0.0
        %735 = vmatprep.subr.mxu0 0.0
        %736 = vmatpush1.msra.mxu0 0.0
        %737 = vmatprep.subr.mxu0 0.0
        %738 = vmatpush1.msra.mxu0 0.0
        %739 = vmatprep.subr.mxu0 0.0
        %740 = vmatpush1.msra.mxu0 0.0
        %741 = vmatprep.subr.mxu0 0.0
        %742 = vmatpush1.msra.mxu0 0.0
        %743 = vmatprep.subr.mxu0 0.0
        %744 = vmatpush1.msra.mxu0 0.0
        %745 = vmatprep.subr.mxu0 0.0
        %746 = vmatpush1.msra.mxu0 0.0
        %747 = vmatprep.subr.mxu0 0.0
        %748 = vmatpush1.msra.mxu0 0.0
        %749 = vmatprep.subr.mxu0 0.0
        %750 = vmatpush1.msra.mxu0 0.0
        %751 = vmatprep.subr.mxu0 0.0
        %752 = vmatpush1.msra.mxu0 0.0
        %753 = vmatprep.subr.mxu0 0.0
        %754 = vmatpush1.msra.mxu0 0.0
        %755 = vmatprep.subr.mxu0 0.0
        %756 = vmatpush1.msra.mxu0 0.0
        %757 = vmatprep.mubr.f32.mxu0 0.0
        %758 = vmatmul.mubr.f32.gmra.mrb[0].mxu0 %v646
        %v759 = vpop.f32.mrb[0].mxu0
        %v760 = vadd.f32 0.0, %v759
        %v761 = vpop.f32.mrb[0].mxu0
        %762 = vmatprep.mubr.f32.mxu0 0.0
        %763 = vmatmul.mubr.f32.gmra.mrb[0].mxu0 %v649
        %v764 = vpop.f32.mrb[0].mxu0
        %v765 = vadd.f32 0.0, %v764
        %v766 = vpop.f32.mrb[0].mxu0
        %767 = vmatprep.mubr.f32.mxu0 0.0
        %768 = vmatmul.mubr.f32.gmra.mrb[0].mxu0 %v652
        %v769 = vpop.f32.mrb[0].mxu0
        %v770 = vadd.f32 0.0, %v769
        %v771 = vpop.f32.mrb[0].mxu0
        %772 = vmatprep.mubr.f32.mxu0 0.0
        %773 = vmatmul.mubr.f32.gmra.mrb[0].mxu0 %v655
        %v774 = vpop.f32.mrb[0].mxu0
        %v775 = vadd.f32 0.0, %v774
        %v776 = vpop.f32.mrb[0].mxu0
        %777 = vmatprep.mubr.f32.mxu0 0.0
        %778 = vmatmul.mubr.f32.gmra.mrb[0].mxu0 %v658
        %v779 = vpop.f32.mrb[0].mxu0
        %v780 = vadd.f32 0.0, %v779
        %v781 = vpop.f32.mrb[0].mxu0
        %782 = vmatprep.mubr.f32.mxu0 0.0
        %783 = vmatmul.mubr.f32.gmra.mrb[0].mxu0 %v661
        %v784 = vpop.f32.mrb[0].mxu0
        %v785 = vadd.f32 0.0, %v784
        %v786 = vpop.f32.mrb[0].mxu0
        %787 = vmatprep.mubr.f32.mxu0 0.0
        %788 = vmatmul.mubr.f32.gmra.mrb[0].mxu0 %v664
        %v789 = vpop.f32.mrb[0].mxu0
        %v790 = vadd.f32 0.0, %v789
        %v791 = vpop.f32.mrb[0].mxu0
        %792 = vmatprep.mubr.f32.mxu0 0.0
        %793 = vmatmul.mubr.f32.gmra.mrb[0].mxu0 %v667
        %v794 = vpop.f32.mrb[0].mxu0
        %v795 = vadd.f32 0.0, %v794
        %v796 = vpop.f32.mrb[0].mxu0
        %797 = vmatprep.mubr.f32.mxu0 0.0
        %798 = vmatmul.mubr.f32.gmra.mrb[0].mxu0 %v670
        %v799 = vpop.f32.mrb[0].mxu0
        %v800 = vadd.f32 0.0, %v799
        %v801 = vpop.f32.mrb[0].mxu0
        %802 = vmatprep.mubr.f32.mxu0 0.0
        %803 = vmatmul.mubr.f32.gmra.mrb[0].mxu0 %v673
        %v804 = vpop.f32.mrb[0].mxu0
        %v805 = vadd.f32 0.0, %v804
        %v806 = vpop.f32.mrb[0].mxu0
        %807 = vmatprep.mubr.f32.mxu0 0.0
        %808 = vmatmul.mubr.f32.gmra.mrb[0].mxu0 %v676
        %v809 = vpop.f32.mrb[0].mxu0
        %v810 = vadd.f32 0.0, %v809
        %v811 = vpop.f32.mrb[0].mxu0
        %812 = vmatprep.mubr.f32.mxu0 0.0
        %813 = vmatmul.mubr.f32.gmra.mrb[0].mxu0 %v679
        %v814 = vpop.f32.mrb[0].mxu0
        %v815 = vadd.f32 0.0, %v814
        %v816 = vpop.f32.mrb[0].mxu0
        %817 = vmatprep.mubr.f32.mxu0 0.0
        %818 = vmatmul.mubr.f32.gmra.mrb[0].mxu0 %v682
        %v819 = vpop.f32.mrb[0].mxu0
        %v820 = vadd.f32 0.0, %v819
        %v821 = vpop.f32.mrb[0].mxu0
        %822 = vmatprep.mubr.f32.mxu0 0.0
        %823 = vmatmul.mubr.f32.gmra.mrb[0].mxu0 %v685
        %v824 = vpop.f32.mrb[0].mxu0
        %v825 = vadd.f32 0.0, %v824
        %v826 = vpop.f32.mrb[0].mxu0
        %827 = vmatprep.mubr.f32.mxu0 0.0
        %828 = vmatmul.mubr.f32.gmra.mrb[0].mxu0 %v688
        %v829 = vpop.f32.mrb[0].mxu0
        %v830 = vadd.f32 0.0, %v829
        %v831 = vpop.f32.mrb[0].mxu0
        %832 = vmatprep.mubr.f32.mxu0 0.0
        %833 = vmatmul.mubr.f32.gmra.mrb[0].mxu0 %v691
        %v834 = vpop.f32.mrb[0].mxu0
        %v835 = vadd.f32 0.0, %v834
        %v836 = vpop.f32.mrb[0].mxu0
        %837 = vdwg.mxu0
        %838 = vmax.xlane.f32.xlu0 %v760
        %v839 = vpop.xlane.xlu0 %838
        %840 = vmax.xlane.f32.xlu0 %v765
        %v841 = vpop.xlane.xlu0 %840
        %842 = vmax.xlane.f32.xlu0 %v770
        %v843 = vpop.xlane.xlu0 %842
        %844 = vmax.xlane.f32.xlu0 %v775
        %v845 = vpop.xlane.xlu0 %844
        %846 = vmax.xlane.f32.xlu0 %v780
        %v847 = vpop.xlane.xlu0 %846
        %848 = vmax.xlane.f32.xlu0 %v785
        %v849 = vpop.xlane.xlu0 %848
        %850 = vmax.xlane.f32.xlu0 %v790
        %v851 = vpop.xlane.xlu0 %850
        %852 = vmax.xlane.f32.xlu0 %v795
        %v853 = vpop.xlane.xlu0 %852
        %854 = vmax.xlane.f32.xlu0 %v800
        %v855 = vpop.xlane.xlu0 %854
        %856 = vmax.xlane.f32.xlu0 %v805
        %v857 = vpop.xlane.xlu0 %856
        %858 = vmax.xlane.f32.xlu0 %v810
        %v859 = vpop.xlane.xlu0 %858
        %860 = vmax.xlane.f32.xlu0 %v815
        %v861 = vpop.xlane.xlu0 %860
        %862 = vmax.xlane.f32.xlu0 %v820
        %v863 = vpop.xlane.xlu0 %862
        %864 = vmax.xlane.f32.xlu0 %v825
        %v865 = vpop.xlane.xlu0 %864
        %866 = vmax.xlane.f32.xlu0 %v830
        %v867 = vpop.xlane.xlu0 %866
        %868 = vmax.xlane.f32.xlu0 %v835
        %v869 = vpop.xlane.xlu0 %868
        %v870 = vsub.f32 %v760, %v839
        %v871 = vsub.f32 %v765, %v841
        %v872 = vsub.f32 %v770, %v843
        %v873 = vsub.f32 %v775, %v845
        %v874 = vsub.f32 %v780, %v847
        %v875 = vsub.f32 %v785, %v849
        %v876 = vsub.f32 %v790, %v851
        %v877 = vsub.f32 %v795, %v853
        %v878 = vsub.f32 %v800, %v855
        %v879 = vsub.f32 %v805, %v857
        %v880 = vsub.f32 %v810, %v859
        %v881 = vsub.f32 %v815, %v861
        %v882 = vsub.f32 %v820, %v863
        %v883 = vsub.f32 %v825, %v865
        %v884 = vsub.f32 %v830, %v867
        %v885 = vsub.f32 %v835, %v869
        %v886 = vmul.f32 %v870, 1.442695
        %v887 = vpow.pop %v886
        %v888 = vmul.f32 %v871, 1.442695
        %v889 = vpow.pop %v888
        %v890 = vmul.f32 %v872, 1.442695
        %v891 = vpow.pop %v890
        %v892 = vmul.f32 %v873, 1.442695
        %v893 = vpow.pop %v892
        %v894 = vmul.f32 %v874, 1.442695
        %v895 = vpow.pop %v894
        %v896 = vmul.f32 %v875, 1.442695
        %v897 = vpow.pop %v896
        %v898 = vmul.f32 %v876, 1.442695
        %v899 = vpow.pop %v898
        %v900 = vmul.f32 %v877, 1.442695
        %v901 = vpow.pop %v900
        %v902 = vmul.f32 %v878, 1.442695
        %v903 = vpow.pop %v902
        %v904 = vmul.f32 %v879, 1.442695
        %v905 = vpow.pop %v904
        %v906 = vmul.f32 %v880, 1.442695
        %v907 = vpow.pop %v906
        %v908 = vmul.f32 %v881, 1.442695
        %v909 = vpow.pop %v908
        %v910 = vmul.f32 %v882, 1.442695
        %v911 = vpow.pop %v910
        %v912 = vmul.f32 %v883, 1.442695
        %v913 = vpow.pop %v912
        %v914 = vmul.f32 %v884, 1.442695
        %v915 = vpow.pop %v914
        %v916 = vmul.f32 %v885, 1.442695
        %v917 = vpow.pop %v916
        %918 = vadd.xlane.f32.xlu0 %v887
        %v919 = vpop.xlane.xlu0 %918
        %920 = vadd.xlane.f32.xlu0 %v889
        %v921 = vpop.xlane.xlu0 %920
        %922 = vadd.xlane.f32.xlu0 %v891
        %v923 = vpop.xlane.xlu0 %922
        %924 = vadd.xlane.f32.xlu0 %v893
        %v925 = vpop.xlane.xlu0 %924
        %926 = vadd.xlane.f32.xlu0 %v895
        %v927 = vpop.xlane.xlu0 %926
        %928 = vadd.xlane.f32.xlu0 %v897
        %v929 = vpop.xlane.xlu0 %928
        %930 = vadd.xlane.f32.xlu0 %v899
        %v931 = vpop.xlane.xlu0 %930
        %932 = vadd.xlane.f32.xlu0 %v901
        %v933 = vpop.xlane.xlu0 %932
        %934 = vadd.xlane.f32.xlu0 %v903
        %v935 = vpop.xlane.xlu0 %934
        %936 = vadd.xlane.f32.xlu0 %v905
        %v937 = vpop.xlane.xlu0 %936
        %938 = vadd.xlane.f32.xlu0 %v907
        %v939 = vpop.xlane.xlu0 %938
        %940 = vadd.xlane.f32.xlu0 %v909
        %v941 = vpop.xlane.xlu0 %940
        %942 = vadd.xlane.f32.xlu0 %v911
        %v943 = vpop.xlane.xlu0 %942
        %944 = vadd.xlane.f32.xlu0 %v913
        %v945 = vpop.xlane.xlu0 %944
        %946 = vadd.xlane.f32.xlu0 %v915
        %v947 = vpop.xlane.xlu0 %946
        %948 = vadd.xlane.f32.xlu0 %v917
        %v949 = vpop.xlane.xlu0 %948
        %v950 = vrcp.pop %v919
        %v951 = vrcp.pop %v921
        %v952 = vrcp.pop %v923
        %v953 = vrcp.pop %v925
        %v954 = vrcp.pop %v927
        %v955 = vrcp.pop %v929
        %v956 = vrcp.pop %v931
        %v957 = vrcp.pop %v933
        %v958 = vrcp.pop %v935
        %v959 = vrcp.pop %v937
        %v960 = vrcp.pop %v939
        %v961 = vrcp.pop %v941
        %v962 = vrcp.pop %v943
        %v963 = vrcp.pop %v945
        %v964 = vrcp.pop %v947
        %v965 = vrcp.pop %v949
        %v966 = vmul.f32 %v887, %v950
        %v967 = vmul.f32 %v889, %v951
        %v968 = vmul.f32 %v891, %v952
        %v969 = vmul.f32 %v893, %v953
        %v970 = vmul.f32 %v895, %v954
        %v971 = vmul.f32 %v897, %v955
        %v972 = vmul.f32 %v899, %v956
        %v973 = vmul.f32 %v901, %v957
        %v974 = vmul.f32 %v903, %v958
        %v975 = vmul.f32 %v905, %v959
        %v976 = vmul.f32 %v907, %v960
        %v977 = vmul.f32 %v909, %v961
        %v978 = vmul.f32 %v911, %v962
        %v979 = vmul.f32 %v913, %v963
        %v980 = vmul.f32 %v915, %v964
        %v981 = vmul.f32 %v917, %v965
        %982 = vst [vmem:[%s314] sm:$0xff] %v966
        %983 = vst [vmem:[%s314 + $0x8] sm:$0xff] %v967
        %984 = vst [vmem:[%s314 + $0x10] sm:$0xff] %v968
        %985 = vst [vmem:[%s314 + $0x18] sm:$0xff] %v969
        %986 = vst [vmem:[%s314 + $0x20] sm:$0xff] %v970
        %987 = vst [vmem:[%s314 + $0x28] sm:$0xff] %v971
        %988 = vst [vmem:[%s314 + $0x30] sm:$0xff] %v972
        %989 = vst [vmem:[%s314 + $0x38] sm:$0xff] %v973
        %990 = vst [vmem:[%s314 + $0x40] sm:$0xff] %v974
        %991 = vst [vmem:[%s314 + $0x48] sm:$0xff] %v975
        %992 = vst [vmem:[%s314 + $0x50] sm:$0xff] %v976
        %993 = vst [vmem:[%s314 + $0x58] sm:$0xff] %v977
        %994 = vst [vmem:[%s314 + $0x60] sm:$0xff] %v978
        %995 = vst [vmem:[%s314 + $0x68] sm:$0xff] %v979
        %996 = vst [vmem:[%s314 + $0x70] sm:$0xff] %v980
        %997 = vst [vmem:[%s314 + $0x78] sm:$0xff] %v981
        %998 = vmatprep.subr.mxu0 0.0
        %999 = vmatpush1.xpose.msra.mxu0 %v966
        %1000 = vmatprep.subr.mxu0 0.0
        %1001 = vmatpush1.xpose.msra.mxu0 %v967
        %1002 = vmatprep.subr.mxu0 0.0
        %1003 = vmatpush1.xpose.msra.mxu0 %v968
        %1004 = vmatprep.subr.mxu0 0.0
        %1005 = vmatpush1.xpose.msra.mxu0 %v969
        %1006 = vmatprep.subr.mxu0 0.0
        %1007 = vmatpush1.xpose.msra.mxu0 %v970
        %1008 = vmatprep.subr.mxu0 0.0
        %1009 = vmatpush1.xpose.msra.mxu0 %v971
        %1010 = vmatprep.subr.mxu0 0.0
        %1011 = vmatpush1.xpose.msra.mxu0 %v972
        %1012 = vmatprep.subr.mxu0 0.0
        %1013 = vmatpush1.xpose.msra.mxu0 %v973
        %1014 = vmatprep.subr.mxu0 0.0
        %1015 = vmatpush1.xpose.msra.mxu0 %v974
        %1016 = vmatprep.subr.mxu0 0.0
        %1017 = vmatpush1.xpose.msra.mxu0 %v975
        %1018 = vmatprep.subr.mxu0 0.0
        %1019 = vmatpush1.xpose.msra.mxu0 %v976
        %1020 = vmatprep.subr.mxu0 0.0
        %1021 = vmatpush1.xpose.msra.mxu0 %v977
        %1022 = vmatprep.subr.mxu0 0.0
        %1023 = vmatpush1.xpose.msra.mxu0 %v978
        %1024 = vmatprep.subr.mxu0 0.0
        %1025 = vmatpush1.xpose.msra.mxu0 %v979
        %1026 = vmatprep.subr.mxu0 0.0
        %1027 = vmatpush1.xpose.msra.mxu0 %v980
        %1028 = vmatprep.subr.mxu0 0.0
        %1029 = vmatpush1.xpose.msra.mxu0 %v981
        %1030 = vmatprep.subr.mxu0 0.0
        %1031 = vmatpush1.xpose.msra.mxu0 0.0
        %1032 = vmatprep.subr.mxu0 0.0
        %1033 = vmatpush1.xpose.msra.mxu0 0.0
        %1034 = vmatprep.subr.mxu0 0.0
        %1035 = vmatpush1.xpose.msra.mxu0 0.0
        %1036 = vmatprep.subr.mxu0 0.0
        %1037 = vmatpush1.xpose.msra.mxu0 0.0
        %1038 = vmatprep.subr.mxu0 0.0
        %1039 = vmatpush1.xpose.msra.mxu0 0.0
        %1040 = vmatprep.subr.mxu0 0.0
        %1041 = vmatpush1.xpose.msra.mxu0 0.0
        %1042 = vmatprep.subr.mxu0 0.0
        %1043 = vmatpush1.xpose.msra.mxu0 0.0
        %1044 = vmatprep.subr.mxu0 0.0
        %1045 = vmatpush1.xpose.msra.mxu0 0.0
        %1046 = vmatprep.subr.mxu0 0.0
        %1047 = vmatpush1.xpose.msra.mxu0 0.0
        %1048 = vmatprep.subr.mxu0 0.0
        %1049 = vmatpush1.xpose.msra.mxu0 0.0
        %1050 = vmatprep.subr.mxu0 0.0
        %1051 = vmatpush1.xpose.msra.mxu0 0.0
        %1052 = vmatprep.subr.mxu0 0.0
        %1053 = vmatpush1.xpose.msra.mxu0 0.0
        %1054 = vmatprep.subr.mxu0 0.0
        %1055 = vmatpush1.xpose.msra.mxu0 0.0
        %1056 = vmatprep.subr.mxu0 0.0
        %1057 = vmatpush1.xpose.msra.mxu0 0.0
        %1058 = vmatprep.subr.mxu0 0.0
        %1059 = vmatpush1.xpose.msra.mxu0 0.0
        %1060 = vmatprep.subr.mxu0 0.0
        %1061 = vmatpush1.xpose.msra.mxu0 0.0
        %1062 = vmatprep.mubr.f32.mxu0 0.0
        %1063 = vmatmul.mubr.f32.gmra.mrb[0].mxu0 %v566
        %v1064 = vpop.f32.mrb[0].mxu0
        %v1065 = vadd.f32 0.0, %v1064
        %v1066 = vpop.f32.mrb[0].mxu0
        %1067 = vmatprep.mubr.f32.mxu0 0.0
        %1068 = vmatmul.mubr.f32.gmra.mrb[0].mxu0 %v571
        %v1069 = vpop.f32.mrb[0].mxu0
        %v1070 = vadd.f32 0.0, %v1069
        %v1071 = vpop.f32.mrb[0].mxu0
        %1072 = vmatprep.mubr.f32.mxu0 0.0
        %1073 = vmatmul.mubr.f32.gmra.mrb[0].mxu0 %v576
        %v1074 = vpop.f32.mrb[0].mxu0
        %v1075 = vadd.f32 0.0, %v1074
        %v1076 = vpop.f32.mrb[0].mxu0
        %1077 = vmatprep.mubr.f32.mxu0 0.0
        %1078 = vmatmul.mubr.f32.gmra.mrb[0].mxu0 %v581
        %v1079 = vpop.f32.mrb[0].mxu0
        %v1080 = vadd.f32 0.0, %v1079
        %v1081 = vpop.f32.mrb[0].mxu0
        %1082 = vmatprep.mubr.f32.mxu0 0.0
        %1083 = vmatmul.mubr.f32.gmra.mrb[0].mxu0 %v586
        %v1084 = vpop.f32.mrb[0].mxu0
        %v1085 = vadd.f32 0.0, %v1084
        %v1086 = vpop.f32.mrb[0].mxu0
        %1087 = vmatprep.mubr.f32.mxu0 0.0
        %1088 = vmatmul.mubr.f32.gmra.mrb[0].mxu0 %v591
        %v1089 = vpop.f32.mrb[0].mxu0
        %v1090 = vadd.f32 0.0, %v1089
        %v1091 = vpop.f32.mrb[0].mxu0
        %1092 = vmatprep.mubr.f32.mxu0 0.0
        %1093 = vmatmul.mubr.f32.gmra.mrb[0].mxu0 %v596
        %v1094 = vpop.f32.mrb[0].mxu0
        %v1095 = vadd.f32 0.0, %v1094
        %v1096 = vpop.f32.mrb[0].mxu0
        %1097 = vmatprep.mubr.f32.mxu0 0.0
        %1098 = vmatmul.mubr.f32.gmra.mrb[0].mxu0 %v601
        %v1099 = vpop.f32.mrb[0].mxu0
        %v1100 = vadd.f32 0.0, %v1099
        %v1101 = vpop.f32.mrb[0].mxu0
        %1102 = vdwg.mxu0
        %1103 = vst [vmem:[%s300] sm:$0xff] %v1065
        %1104 = vst [vmem:[%s300 + $0x8] sm:$0xff] %v1070
        %1105 = vst [vmem:[%s300 + $0x10] sm:$0xff] %v1075
        %1106 = vst [vmem:[%s300 + $0x18] sm:$0xff] %v1080
        %1107 = vst [vmem:[%s300 + $0x20] sm:$0xff] %v1085
        %1108 = vst [vmem:[%s300 + $0x28] sm:$0xff] %v1090
        %1109 = vst [vmem:[%s300 + $0x30] sm:$0xff] %v1095
        %1110 = vst [vmem:[%s300 + $0x38] sm:$0xff] %v1100
        %s1111 = sand.u32 %s146, 1
        %s1112 = scalar_lea.sflag [#allocation4], %s1111
        %s1113 = sand.u32 %s146, 1
        %s1114 = smul.addr %s1113, 64
        %s1115 = scalar_lea.vmem [#allocation5], %s1114
        %s1116 = sand.u32 %s28, 1
        %s1117 = scalar_lea.sflag [#allocation7], %s1116
        %s1118 = sand.u32 %s172, 1
        %s1119 = smul.addr %s1118, 64
        %s1120 = scalar_lea.vmem [#allocation6], %s1119
        %s1121 = sand.u32 %s28, 1
        %s1122 = scalar_lea.sflag [#allocation7], %s1121
        %s1123 = sand.u32 %s198, 1
        %s1124 = smul.addr %s1123, 128
        %s1125 = scalar_lea.vmem [#allocation8], %s1124
        // Predicated region
        $region45: #{tpu_custom_call.1} parent=39 // pred_check
          %p1126 = pneg %p156
        $region46: #{tpu_custom_call.1} parent=39 // pred_check_branch
          %1128 = sbr.rel (%p1126) target = $region48
        $region47: #{tpu_custom_call.1} parent=39 // pred_region
          %s1130 = ssub.s32 1024, 1024
          %1131 = vsyncadd %s1112, %s1130
          %s1132 = smul.addr %s28, 8
          %s1133 = smul.addr %s1132, 128
          %s1134 = scalar_lea.hbm %s5, %s1133
          %s1135 = sshll.u32 %s1115, 4
          %s1136 = int_to_ptr.vmem [resolvable:$true] %s1135
          %1141 = dma.vmem_to_hbm [thread:$0]  %s1136, 1024, %s1134, %s1112, 128, 128, 8
        $region48: #{tpu_custom_call.1} parent=39 // pred_fallthru
          _
        // Predicated region
        $region49: #{tpu_custom_call.1} parent=39 // pred_check
          %p1142 = pneg %p182
        $region50: #{tpu_custom_call.1} parent=39 // pred_check_branch
          %1144 = sbr.rel (%p1142) target = $region52
        $region51: #{tpu_custom_call.1} parent=39 // pred_region
          %s1146 = ssub.s32 1024, 1024
          %1147 = vsyncadd %s1117, %s1146
          %s1148 = smul.addr %s28, 8
          %s1149 = smul.addr %s1148, 128
          %s1150 = scalar_lea.hbm %s6, %s1149
          %s1151 = sshll.u32 %s1120, 4
          %s1152 = int_to_ptr.vmem [resolvable:$true] %s1151
          %1157 = dma.vmem_to_hbm [thread:$0]  %s1152, 1024, %s1150, %s1117, 128, 128, 8
        $region52: #{tpu_custom_call.1} parent=39 // pred_fallthru
          _
        // Predicated region
        $region53: #{tpu_custom_call.1} parent=39 // pred_check
          %p1158 = pneg %p208
        $region54: #{tpu_custom_call.1} parent=39 // pred_check_branch
          %1160 = sbr.rel (%p1158) target = $region56
        $region55: #{tpu_custom_call.1} parent=39 // pred_region
          %s1162 = ssub.s32 2048, 2048
          %1163 = vsyncadd %s1122, %s1162
          %s1164 = smul.addr %s28, 16
          %s1165 = smul.addr %s1164, 128
          %s1166 = scalar_lea.hbm %s7, %s1165
          %s1167 = sshll.u32 %s1125, 4
          %s1168 = int_to_ptr.vmem [resolvable:$true] %s1167
          %1173 = dma.vmem_to_hbm [thread:$0]  %s1168, 2048, %s1166, %s1122, 128, 128, 8
        $region56: #{tpu_custom_call.1} parent=39 // pred_fallthru
          _
      $region40: #{tpu_custom_call.1} parent=5 // pred_fallthru
        _
      %p1174 = scmp.le.s32.totalorder 2, %s23
      // Predicated region
      $region57: #{tpu_custom_call.1} parent=5 // pred_check
        %p1175 = pneg %p1174
      $region58: #{tpu_custom_call.1} parent=5 // pred_check_branch
        %1177 = sbr.rel (%p1175) target = $region60
      $region59: #{tpu_custom_call.1} parent=5 // pred_region
        %s1178 = ssub.s32 %s23, 2
        // Predicated region
        $region61: #{tpu_custom_call.1} parent=59 // pred_check
          %p1179 = pneg %p162
        $region62: #{tpu_custom_call.1} parent=59 // pred_check_branch
          %1181 = sbr.rel (%p1179) target = $region64
        $region63: #{tpu_custom_call.1} parent=59 // pred_region
          %s1182 = sand.u32 %s147, 1
          %s1183 = scalar_lea.sflag [#allocation4], %s1182
          %s1184 = sand.u32 %s147, 1
          %s1185 = smul.addr %s1184, 64
          %s1186 = scalar_lea.vmem [#allocation5], %s1185
          %1187 = dma.done %s1183, 1024
        $region64: #{tpu_custom_call.1} parent=59 // pred_fallthru
          _
        // Predicated region
        $region65: #{tpu_custom_call.1} parent=59 // pred_check
          %p1188 = pneg %p188
        $region66: #{tpu_custom_call.1} parent=59 // pred_check_branch
          %1190 = sbr.rel (%p1188) target = $region68
        $region67: #{tpu_custom_call.1} parent=59 // pred_region
          %s1191 = sand.u32 %s29, 1
          %s1192 = scalar_lea.sflag [#allocation7], %s1191
          %s1193 = sand.u32 %s173, 1
          %s1194 = smul.addr %s1193, 64
          %s1195 = scalar_lea.vmem [#allocation6], %s1194
          %1196 = dma.done %s1192, 1024
        $region68: #{tpu_custom_call.1} parent=59 // pred_fallthru
          _
        // Predicated region
        $region69: #{tpu_custom_call.1} parent=59 // pred_check
          %p1197 = pneg %p214
        $region70: #{tpu_custom_call.1} parent=59 // pred_check_branch
          %1199 = sbr.rel (%p1197) target = $region72
        $region71: #{tpu_custom_call.1} parent=59 // pred_region
          %s1200 = sand.u32 %s29, 1
          %s1201 = scalar_lea.sflag [#allocation7], %s1200
          %s1202 = sand.u32 %s199, 1
          %s1203 = smul.addr %s1202, 128
          %s1204 = scalar_lea.vmem [#allocation8], %s1203
          %1205 = dma.done %s1201, 2048
        $region72: #{tpu_custom_call.1} parent=59 // pred_fallthru
          _
      $region60: #{tpu_custom_call.1} parent=5 // pred_fallthru
        _
    $region6: #{tpu_custom_call.1} parent=1 // loop_footer
      %s27 = sadd.s32 1, %s23
    $region7: #{tpu_custom_call.1} parent=1 // loop_footer_branch
      %22 = sbr.rel target = $region3
    $region8: #{tpu_custom_call.1} parent=1 // loop_exit
      _
    %1206 = vsyncpa [#allocation3], 1
    %s1207 = scalar_lea.sflag [#allocation3], 1
    %1208 = vsyncpa %s1207, 1
    %1209 = vsyncpa [#allocation4], 1
    %s1210 = scalar_lea.sflag [#allocation4], 1
    %1211 = vsyncpa %s1210, 1
    %1212 = vsyncpa [#allocation7], 1
    %s1213 = scalar_lea.sflag [#allocation7], 1
    %1214 = vsyncpa %s1213, 1

</llo_original>
